<compile_context>
chip_gen: v7x
topology: tpu7x:2x2x1
jax: 0.10.0
libtpu: 0.0.40
codegen_flags: <defaults>
</compile_context>

<pallas_src>
import jax
import jax.numpy as jnp
from jax.experimental import pallas as pl
from jax.experimental.pallas import tpu as pltpu


def action_embedding_kernel(act_ref, tbl_ref, out_ref):
    # act_ref: (B, S*D) int32  -- action id repeated D times per sequence position (lane-dense)
    # tbl_ref: (V, S*D) f32    -- (emb row v tiled S times) + flattened positional encoding
    # out_ref: (B, S*D) f32
    acts = act_ref[...]                                   # (B, S*D) int32
    V = tbl_ref.shape[0]

    # Seed the select chain with row 0 (covers acts == 0; out-of-range ids also land here).
    acc = jnp.broadcast_to(tbl_ref[0, :][None, :], acts.shape)
    # Unrolled VPU select chain: V-1 compare/select passes, static sublane row slices, no MXU.
    for v in range(1, V):
        acc = jnp.where(acts == v, tbl_ref[v, :][None, :], acc)

    out_ref[...] = acc                                    # lane-dense (2 full lane tiles) store


def make_fused_table(emb_table, pos_enc):
    """Parameter-only transform, built once: (V, D), (1, S, D) -> (V, S*D) with pos folded in."""
    V, D = emb_table.shape
    _, S, _ = pos_enc.shape
    return jnp.tile(emb_table, (1, S)) + pos_enc.reshape(1, S * D)


@jax.jit
def action_embedding(actions, fused_table):
    """actions: (B, S) int; fused_table: (V, S*D) f32 -> (B, S, D) f32."""
    B, S = actions.shape
    V, N = fused_table.shape
    D = N // S

    # Lane-dense index layout: id repeated per lane. Allowed to fuse into the pallas_call operand.
    acts_rep = jnp.repeat(actions.astype(jnp.int32), D, axis=1)      # (B, S*D)

    cost = pl.CostEstimate(
        flops=2 * V * B * N,              # compare + select per pass (advisory only)
        transcendentals=0,
        bytes_accessed=4 * (B * N + V * N + B * N),
    )

    out_flat = pl.pallas_call(
        action_embedding_kernel,
        out_shape=jax.ShapeDtypeStruct((B, N), jnp.float32),
        in_specs=[
            pl.BlockSpec(memory_space=pltpu.MemorySpace.VMEM),        # whole array, single buffer
            pl.BlockSpec(memory_space=pltpu.MemorySpace.VMEM),
        ],
        out_specs=pl.BlockSpec(memory_space=pltpu.MemorySpace.VMEM),
        compiler_params=pltpu.CompilerParams(allow_input_fusion=[True, True]),
        cost_estimate=cost,
    )(acts_rep, fused_table)

    return out_flat.reshape(B, S, D)                                  # free contiguous reshape


if __name__ == "__main__":
    # Module hyperparameters (small, consistent with the forward pass).
    num_actions = 10
    embedding_dim = 32
    seq_len = 8
    batch = 2
    V = num_actions + 1  # nn.Embedding(num_actions + 1, embedding_dim)

    key = jax.random.PRNGKey(0)
    k_emb, k_pos, k_act = jax.random.split(key, 3)

    # nn.Embedding default init ~ N(0, 1).
    emb_table = jax.random.normal(k_emb, (V, embedding_dim), dtype=jnp.float32)
    # PyTorch inits positional_encoding to zeros; use a small deterministic nonzero value here so
    # the folded-positional path is actually exercised numerically.
    pos_enc = 0.01 * jax.random.normal(k_pos, (1, seq_len, embedding_dim), dtype=jnp.float32)

    actions = jax.random.randint(k_act, (batch, seq_len), 0, V, dtype=jnp.int32)

    # Hoisted, parameter-only table build (done once, outside the per-call path).
    fused_table = make_fused_table(emb_table, pos_enc)

    out = action_embedding(actions, fused_table)
    out = jax.block_until_ready(out)

    # Reference (pure JAX) check of the forward semantics: embedding lookup + positional add.
    ref = jnp.take(emb_table, actions, axis=0) + pos_enc
    assert out.shape == (batch, seq_len, embedding_dim)
    assert jnp.allclose(out, ref, atol=1e-5, rtol=1e-5)

    print("KERNEL_OK")
</pallas_src>

<mosaic_0001>
module attributes {stable_mosaic.version = 11 : i64} {
  func.func @action_embedding_kernel(%arg0: memref<2x256xi32, #tpu.memory_space<vmem>>, %arg1: memref<11x256xf32, #tpu.memory_space<vmem>>, %arg2: memref<2x256xf32, #tpu.memory_space<vmem>>) attributes {dimension_semantics = [], scalar_prefetch = 0 : i64, scratch_operands = 0 : i64, tpu.core_type = #tpu.core_type<tc>} {
    %c0 = arith.constant 0 : index
    %c0_0 = arith.constant 0 : index
    %0 = vector.load %arg0[%c0, %c0_0] : memref<2x256xi32, #tpu.memory_space<vmem>>, vector<2x256xi32>
    %c0_1 = arith.constant 0 : index
    %c0_2 = arith.constant 0 : index
    %1 = vector.load %arg1[%c0_1, %c0_2] : memref<11x256xf32, #tpu.memory_space<vmem>>, vector<1x256xf32>
    %2 = vector.shape_cast %1 : vector<1x256xf32> to vector<256xf32>
    %3 = vector.shape_cast %2 : vector<256xf32> to vector<1x256xf32>
    %4 = vector.shape_cast %3 : vector<1x256xf32> to vector<1x256xf32>
    %5 = vector.broadcast %4 : vector<1x256xf32> to vector<2x256xf32>
    %c1_i32 = arith.constant 1 : i32
    %6 = vector.broadcast %c1_i32 : i32 to vector<2x256xi32>
    %7 = arith.cmpi eq, %0, %6 : vector<2x256xi32>
    %c1 = arith.constant 1 : index
    %c0_3 = arith.constant 0 : index
    %8 = vector.load %arg1[%c1, %c0_3] : memref<11x256xf32, #tpu.memory_space<vmem>>, vector<1x256xf32>
    %9 = vector.shape_cast %8 : vector<1x256xf32> to vector<256xf32>
    %10 = vector.shape_cast %9 : vector<256xf32> to vector<1x256xf32>
    %11 = vector.shape_cast %10 : vector<1x256xf32> to vector<1x256xf32>
    %12 = vector.broadcast %11 : vector<1x256xf32> to vector<2x256xf32>
    %13 = arith.select %7, %12, %5 : vector<2x256xi1>, vector<2x256xf32>
    %c2_i32 = arith.constant 2 : i32
    %14 = vector.broadcast %c2_i32 : i32 to vector<2x256xi32>
    %15 = arith.cmpi eq, %0, %14 : vector<2x256xi32>
    %c2 = arith.constant 2 : index
    %c0_4 = arith.constant 0 : index
    %16 = vector.load %arg1[%c2, %c0_4] : memref<11x256xf32, #tpu.memory_space<vmem>>, vector<1x256xf32>
    %17 = vector.shape_cast %16 : vector<1x256xf32> to vector<256xf32>
    %18 = vector.shape_cast %17 : vector<256xf32> to vector<1x256xf32>
    %19 = vector.shape_cast %18 : vector<1x256xf32> to vector<1x256xf32>
    %20 = vector.broadcast %19 : vector<1x256xf32> to vector<2x256xf32>
    %21 = arith.select %15, %20, %13 : vector<2x256xi1>, vector<2x256xf32>
    %c3_i32 = arith.constant 3 : i32
    %22 = vector.broadcast %c3_i32 : i32 to vector<2x256xi32>
    %23 = arith.cmpi eq, %0, %22 : vector<2x256xi32>
    %c3 = arith.constant 3 : index
    %c0_5 = arith.constant 0 : index
    %24 = vector.load %arg1[%c3, %c0_5] : memref<11x256xf32, #tpu.memory_space<vmem>>, vector<1x256xf32>
    %25 = vector.shape_cast %24 : vector<1x256xf32> to vector<256xf32>
    %26 = vector.shape_cast %25 : vector<256xf32> to vector<1x256xf32>
    %27 = vector.shape_cast %26 : vector<1x256xf32> to vector<1x256xf32>
    %28 = vector.broadcast %27 : vector<1x256xf32> to vector<2x256xf32>
    %29 = arith.select %23, %28, %21 : vector<2x256xi1>, vector<2x256xf32>
    %c4_i32 = arith.constant 4 : i32
    %30 = vector.broadcast %c4_i32 : i32 to vector<2x256xi32>
    %31 = arith.cmpi eq, %0, %30 : vector<2x256xi32>
    %c4 = arith.constant 4 : index
    %c0_6 = arith.constant 0 : index
    %32 = vector.load %arg1[%c4, %c0_6] : memref<11x256xf32, #tpu.memory_space<vmem>>, vector<1x256xf32>
    %33 = vector.shape_cast %32 : vector<1x256xf32> to vector<256xf32>
    %34 = vector.shape_cast %33 : vector<256xf32> to vector<1x256xf32>
    %35 = vector.shape_cast %34 : vector<1x256xf32> to vector<1x256xf32>
    %36 = vector.broadcast %35 : vector<1x256xf32> to vector<2x256xf32>
    %37 = arith.select %31, %36, %29 : vector<2x256xi1>, vector<2x256xf32>
    %c5_i32 = arith.constant 5 : i32
    %38 = vector.broadcast %c5_i32 : i32 to vector<2x256xi32>
    %39 = arith.cmpi eq, %0, %38 : vector<2x256xi32>
    %c5 = arith.constant 5 : index
    %c0_7 = arith.constant 0 : index
    %40 = vector.load %arg1[%c5, %c0_7] : memref<11x256xf32, #tpu.memory_space<vmem>>, vector<1x256xf32>
    %41 = vector.shape_cast %40 : vector<1x256xf32> to vector<256xf32>
    %42 = vector.shape_cast %41 : vector<256xf32> to vector<1x256xf32>
    %43 = vector.shape_cast %42 : vector<1x256xf32> to vector<1x256xf32>
    %44 = vector.broadcast %43 : vector<1x256xf32> to vector<2x256xf32>
    %45 = arith.select %39, %44, %37 : vector<2x256xi1>, vector<2x256xf32>
    %c6_i32 = arith.constant 6 : i32
    %46 = vector.broadcast %c6_i32 : i32 to vector<2x256xi32>
    %47 = arith.cmpi eq, %0, %46 : vector<2x256xi32>
    %c6 = arith.constant 6 : index
    %c0_8 = arith.constant 0 : index
    %48 = vector.load %arg1[%c6, %c0_8] : memref<11x256xf32, #tpu.memory_space<vmem>>, vector<1x256xf32>
    %49 = vector.shape_cast %48 : vector<1x256xf32> to vector<256xf32>
    %50 = vector.shape_cast %49 : vector<256xf32> to vector<1x256xf32>
    %51 = vector.shape_cast %50 : vector<1x256xf32> to vector<1x256xf32>
    %52 = vector.broadcast %51 : vector<1x256xf32> to vector<2x256xf32>
    %53 = arith.select %47, %52, %45 : vector<2x256xi1>, vector<2x256xf32>
    %c7_i32 = arith.constant 7 : i32
    %54 = vector.broadcast %c7_i32 : i32 to vector<2x256xi32>
    %55 = arith.cmpi eq, %0, %54 : vector<2x256xi32>
    %c7 = arith.constant 7 : index
    %c0_9 = arith.constant 0 : index
    %56 = vector.load %arg1[%c7, %c0_9] : memref<11x256xf32, #tpu.memory_space<vmem>>, vector<1x256xf32>
    %57 = vector.shape_cast %56 : vector<1x256xf32> to vector<256xf32>
    %58 = vector.shape_cast %57 : vector<256xf32> to vector<1x256xf32>
    %59 = vector.shape_cast %58 : vector<1x256xf32> to vector<1x256xf32>
    %60 = vector.broadcast %59 : vector<1x256xf32> to vector<2x256xf32>
    %61 = arith.select %55, %60, %53 : vector<2x256xi1>, vector<2x256xf32>
    %c8_i32 = arith.constant 8 : i32
    %62 = vector.broadcast %c8_i32 : i32 to vector<2x256xi32>
    %63 = arith.cmpi eq, %0, %62 : vector<2x256xi32>
    %c8 = arith.constant 8 : index
    %c0_10 = arith.constant 0 : index
    %64 = vector.load %arg1[%c8, %c0_10] : memref<11x256xf32, #tpu.memory_space<vmem>>, vector<1x256xf32>
    %65 = vector.shape_cast %64 : vector<1x256xf32> to vector<256xf32>
    %66 = vector.shape_cast %65 : vector<256xf32> to vector<1x256xf32>
    %67 = vector.shape_cast %66 : vector<1x256xf32> to vector<1x256xf32>
    %68 = vector.broadcast %67 : vector<1x256xf32> to vector<2x256xf32>
    %69 = arith.select %63, %68, %61 : vector<2x256xi1>, vector<2x256xf32>
    %c9_i32 = arith.constant 9 : i32
    %70 = vector.broadcast %c9_i32 : i32 to vector<2x256xi32>
    %71 = arith.cmpi eq, %0, %70 : vector<2x256xi32>
    %c9 = arith.constant 9 : index
    %c0_11 = arith.constant 0 : index
    %72 = vector.load %arg1[%c9, %c0_11] : memref<11x256xf32, #tpu.memory_space<vmem>>, vector<1x256xf32>
    %73 = vector.shape_cast %72 : vector<1x256xf32> to vector<256xf32>
    %74 = vector.shape_cast %73 : vector<256xf32> to vector<1x256xf32>
    %75 = vector.shape_cast %74 : vector<1x256xf32> to vector<1x256xf32>
    %76 = vector.broadcast %75 : vector<1x256xf32> to vector<2x256xf32>
    %77 = arith.select %71, %76, %69 : vector<2x256xi1>, vector<2x256xf32>
    %c10_i32 = arith.constant 10 : i32
    %78 = vector.broadcast %c10_i32 : i32 to vector<2x256xi32>
    %79 = arith.cmpi eq, %0, %78 : vector<2x256xi32>
    %c10 = arith.constant 10 : index
    %c0_12 = arith.constant 0 : index
    %80 = vector.load %arg1[%c10, %c0_12] : memref<11x256xf32, #tpu.memory_space<vmem>>, vector<1x256xf32>
    %81 = vector.shape_cast %80 : vector<1x256xf32> to vector<256xf32>
    %82 = vector.shape_cast %81 : vector<256xf32> to vector<1x256xf32>
    %83 = vector.shape_cast %82 : vector<1x256xf32> to vector<1x256xf32>
    %84 = vector.broadcast %83 : vector<1x256xf32> to vector<2x256xf32>
    %85 = arith.select %79, %84, %77 : vector<2x256xi1>, vector<2x256xf32>
    %c0_13 = arith.constant 0 : index
    %c0_14 = arith.constant 0 : index
    %86 = vector.load %arg2[%c0_13, %c0_14] : memref<2x256xf32, #tpu.memory_space<vmem>>, vector<2x256xf32>
    tpu.vector_store %arg2[%c0_13, %c0_14], %85 {strides = array<i32>} : memref<2x256xf32, #tpu.memory_space<vmem>>, vector<2x256xf32>,
    return
  }
}

</mosaic_0001>

<llo_original>
// kernel: action_embedding.1
$region0: #{action_embedding.1}
  #allocation0 [shape = 'u32[]', space=smem, size = 0x4, offset = 0x4, fixed_abs, tag = 'smem constant byte address 0x4 - core index']
  #allocation1 [shape = 'u32[144,128]{1,0:T(1,128)}', space=vmem, size = 0x12000, scoped, tag = 'internal scratch']
  %s0 = inlined_call_operand.vmem [shape: s32[2,256], index: 0, kind: input, shape index: {}]
  %s1 = inlined_call_operand.vmem [shape: f32[11,256], index: 1, kind: input, shape index: {}]
  %s2 = inlined_call_operand.vmem [shape: f32[2,256], index: 2, kind: output, shape index: {}]
  %s3 = sld [smem:[#allocation0]]
  $region18: #{action_embedding.1} parent=0
    _
  %s5 = ssub.s32 1, %s3
  %s6 = scalar_select 0, %s5, %s3
  // Predicated region
  $region2: #{action_embedding.1} parent=0 // pred_check
    _
  $region3: #{action_embedding.1} parent=0 // pred_check_branch
    %8 = sbr.rel (0) target = $region5
  $region4: #{action_embedding.1} parent=0 // pred_region
    _
  $region5: #{action_embedding.1} parent=0 // pred_fallthru
    _
  // Predicated region
  $region6: #{action_embedding.1} parent=0 // pred_check
    _
  $region7: #{action_embedding.1} parent=0 // pred_check_branch
    %10 = sbr.rel (0) target = $region9
  $region8: #{action_embedding.1} parent=0 // pred_region
    _
  $region9: #{action_embedding.1} parent=0 // pred_fallthru
    _
  %v11 = vld [vmem:[%s0] sm:$0xf]
  %v12 = vld [vmem:[%s1] ss:$8 sm:$0x3]
  %v14 = vlaneseq
  %v15 = vshrl.u32 %v14, 7
  %v16 = vsub.s32 0, %v15
  %v17 = vrot.slane %v12, %v16
  %v18 = vlaneseq
  %v19 = vshrl.u32 %v18, 7
  %v20 = vsub.s32 1, %v19
  %v21 = vrot.slane %v12, %v20
  %vm22 = vcmp.eq.s32.totalorder %v11, 1
  %s23 = scalar_lea.vmem %s1, 1
  %v24 = vld [vmem:[%s23] ss:$8 sm:$0x3]
  %v26 = vlaneseq
  %v27 = vshrl.u32 %v26, 7
  %v28 = vsub.s32 0, %v27
  %v29 = vrot.slane %v24, %v28
  %v30 = vlaneseq
  %v31 = vshrl.u32 %v30, 7
  %v32 = vsub.s32 1, %v31
  %v33 = vrot.slane %v24, %v32
  %v34 = vcombine.low %v29, %v33
  %v36 = vunpack.c.l.s4 1983009808
  %v37 = vunpack.c.0.s8 %v36
  %v38 = vlaneseq
  %v39 = vshrl.u32 %v38, 7
  %v40 = vsub.s32 %v37, %v39
  %v41 = vrot.slane %v34, %v40
  %v43 = vcombine.low %v17, %v21
  %v45 = vunpack.c.l.s4 1983009808
  %v46 = vunpack.c.0.s8 %v45
  %v47 = vlaneseq
  %v48 = vshrl.u32 %v47, 7
  %v49 = vsub.s32 %v46, %v48
  %v50 = vrot.slane %v43, %v49
  %v52 = vsel %vm22, %v41, %v50
  %vm53 = vcmp.eq.s32.totalorder %v11, 2
  %s54 = scalar_lea.vmem %s1, 2
  %v55 = vld [vmem:[%s54] ss:$8 sm:$0x3]
  %v57 = vlaneseq
  %v58 = vshrl.u32 %v57, 7
  %v59 = vsub.s32 0, %v58
  %v60 = vrot.slane %v55, %v59
  %v61 = vlaneseq
  %v62 = vshrl.u32 %v61, 7
  %v63 = vsub.s32 1, %v62
  %v64 = vrot.slane %v55, %v63
  %v65 = vcombine.low %v60, %v64
  %v67 = vunpack.c.l.s4 1983009808
  %v68 = vunpack.c.0.s8 %v67
  %v69 = vlaneseq
  %v70 = vshrl.u32 %v69, 7
  %v71 = vsub.s32 %v68, %v70
  %v72 = vrot.slane %v65, %v71
  %v74 = vsel %vm53, %v72, %v52
  %vm75 = vcmp.eq.s32.totalorder %v11, 3
  %s76 = scalar_lea.vmem %s1, 3
  %v77 = vld [vmem:[%s76] ss:$8 sm:$0x3]
  %v79 = vlaneseq
  %v80 = vshrl.u32 %v79, 7
  %v81 = vsub.s32 0, %v80
  %v82 = vrot.slane %v77, %v81
  %v83 = vlaneseq
  %v84 = vshrl.u32 %v83, 7
  %v85 = vsub.s32 1, %v84
  %v86 = vrot.slane %v77, %v85
  %v87 = vcombine.low %v82, %v86
  %v89 = vunpack.c.l.s4 1983009808
  %v90 = vunpack.c.0.s8 %v89
  %v91 = vlaneseq
  %v92 = vshrl.u32 %v91, 7
  %v93 = vsub.s32 %v90, %v92
  %v94 = vrot.slane %v87, %v93
  %v96 = vsel %vm75, %v94, %v74
  %vm97 = vcmp.eq.s32.totalorder %v11, 4
  %s98 = scalar_lea.vmem %s1, 4
  %v99 = vld [vmem:[%s98] ss:$8 sm:$0x3]
  %v101 = vlaneseq
  %v102 = vshrl.u32 %v101, 7
  %v103 = vsub.s32 0, %v102
  %v104 = vrot.slane %v99, %v103
  %v105 = vlaneseq
  %v106 = vshrl.u32 %v105, 7
  %v107 = vsub.s32 1, %v106
  %v108 = vrot.slane %v99, %v107
  %v109 = vcombine.low %v104, %v108
  %v111 = vunpack.c.l.s4 1983009808
  %v112 = vunpack.c.0.s8 %v111
  %v113 = vlaneseq
  %v114 = vshrl.u32 %v113, 7
  %v115 = vsub.s32 %v112, %v114
  %v116 = vrot.slane %v109, %v115
  %v118 = vsel %vm97, %v116, %v96
  %vm119 = vcmp.eq.s32.totalorder %v11, 5
  %s120 = scalar_lea.vmem %s1, 5
  %v121 = vld [vmem:[%s120] ss:$8 sm:$0x3]
  %v123 = vlaneseq
  %v124 = vshrl.u32 %v123, 7
  %v125 = vsub.s32 0, %v124
  %v126 = vrot.slane %v121, %v125
  %v127 = vlaneseq
  %v128 = vshrl.u32 %v127, 7
  %v129 = vsub.s32 1, %v128
  %v130 = vrot.slane %v121, %v129
  %v131 = vcombine.low %v126, %v130
  %v133 = vunpack.c.l.s4 1983009808
  %v134 = vunpack.c.0.s8 %v133
  %v135 = vlaneseq
  %v136 = vshrl.u32 %v135, 7
  %v137 = vsub.s32 %v134, %v136
  %v138 = vrot.slane %v131, %v137
  %v140 = vsel %vm119, %v138, %v118
  %vm141 = vcmp.eq.s32.totalorder %v11, 6
  %s142 = scalar_lea.vmem %s1, 6
  %v143 = vld [vmem:[%s142] ss:$8 sm:$0x3]
  %v145 = vlaneseq
  %v146 = vshrl.u32 %v145, 7
  %v147 = vsub.s32 0, %v146
  %v148 = vrot.slane %v143, %v147
  %v149 = vlaneseq
  %v150 = vshrl.u32 %v149, 7
  %v151 = vsub.s32 1, %v150
  %v152 = vrot.slane %v143, %v151
  %v153 = vcombine.low %v148, %v152
  %v155 = vunpack.c.l.s4 1983009808
  %v156 = vunpack.c.0.s8 %v155
  %v157 = vlaneseq
  %v158 = vshrl.u32 %v157, 7
  %v159 = vsub.s32 %v156, %v158
  %v160 = vrot.slane %v153, %v159
  %v162 = vsel %vm141, %v160, %v140
  %vm163 = vcmp.eq.s32.totalorder %v11, 7
  %s164 = scalar_lea.vmem %s1, 7
  %v165 = vld [vmem:[%s164] ss:$8 sm:$0x3]
  %v167 = vlaneseq
  %v168 = vshrl.u32 %v167, 7
  %v169 = vsub.s32 0, %v168
  %v170 = vrot.slane %v165, %v169
  %v171 = vlaneseq
  %v172 = vshrl.u32 %v171, 7
  %v173 = vsub.s32 1, %v172
  %v174 = vrot.slane %v165, %v173
  %v175 = vcombine.low %v170, %v174
  %v177 = vunpack.c.l.s4 1983009808
  %v178 = vunpack.c.0.s8 %v177
  %v179 = vlaneseq
  %v180 = vshrl.u32 %v179, 7
  %v181 = vsub.s32 %v178, %v180
  %v182 = vrot.slane %v175, %v181
  %v184 = vsel %vm163, %v182, %v162
  %vm185 = vcmp.eq.s32.totalorder %v11, 8
  %s186 = scalar_lea.vmem %s1, 16
  %v187 = vld [vmem:[%s186] ss:$8 sm:$0x3]
  %v189 = vlaneseq
  %v190 = vshrl.u32 %v189, 7
  %v191 = vsub.s32 0, %v190
  %v192 = vrot.slane %v187, %v191
  %v193 = vlaneseq
  %v194 = vshrl.u32 %v193, 7
  %v195 = vsub.s32 1, %v194
  %v196 = vrot.slane %v187, %v195
  %v197 = vcombine.low %v192, %v196
  %v199 = vunpack.c.l.s4 1983009808
  %v200 = vunpack.c.0.s8 %v199
  %v201 = vlaneseq
  %v202 = vshrl.u32 %v201, 7
  %v203 = vsub.s32 %v200, %v202
  %v204 = vrot.slane %v197, %v203
  %v206 = vsel %vm185, %v204, %v184
  %vm207 = vcmp.eq.s32.totalorder %v11, 9
  %s208 = scalar_lea.vmem %s1, 17
  %v209 = vld [vmem:[%s208] ss:$8 sm:$0x3]
  %v211 = vlaneseq
  %v212 = vshrl.u32 %v211, 7
  %v213 = vsub.s32 0, %v212
  %v214 = vrot.slane %v209, %v213
  %v215 = vlaneseq
  %v216 = vshrl.u32 %v215, 7
  %v217 = vsub.s32 1, %v216
  %v218 = vrot.slane %v209, %v217
  %v219 = vcombine.low %v214, %v218
  %v221 = vunpack.c.l.s4 1983009808
  %v222 = vunpack.c.0.s8 %v221
  %v223 = vlaneseq
  %v224 = vshrl.u32 %v223, 7
  %v225 = vsub.s32 %v222, %v224
  %v226 = vrot.slane %v219, %v225
  %v228 = vsel %vm207, %v226, %v206
  %vm229 = vcmp.eq.s32.totalorder %v11, 10
  %s230 = scalar_lea.vmem %s1, 18
  %v231 = vld [vmem:[%s230] ss:$8 sm:$0x3]
  %v233 = vlaneseq
  %v234 = vshrl.u32 %v233, 7
  %v235 = vsub.s32 0, %v234
  %v236 = vrot.slane %v231, %v235
  %v237 = vlaneseq
  %v238 = vshrl.u32 %v237, 7
  %v239 = vsub.s32 1, %v238
  %v240 = vrot.slane %v231, %v239
  %v241 = vcombine.low %v236, %v240
  %v243 = vunpack.c.l.s4 1983009808
  %v244 = vunpack.c.0.s8 %v243
  %v245 = vlaneseq
  %v246 = vshrl.u32 %v245, 7
  %v247 = vsub.s32 %v244, %v246
  %v248 = vrot.slane %v241, %v247
  %v250 = vsel %vm229, %v248, %v228
  %251 = vst [vmem:[%s2] sm:$0xf] %v250
  // Predicated region
  $region10: #{action_embedding.1} parent=0 // pred_check
    _
  $region11: #{action_embedding.1} parent=0 // pred_check_branch
    %253 = sbr.rel (0) target = $region13
  $region12: #{action_embedding.1} parent=0 // pred_region
    _
  $region13: #{action_embedding.1} parent=0 // pred_fallthru
    _
  // Predicated region
  $region14: #{action_embedding.1} parent=0 // pred_check
    _
  $region15: #{action_embedding.1} parent=0 // pred_check_branch
    %255 = sbr.rel (0) target = $region17
  $region16: #{action_embedding.1} parent=0 // pred_region
    _
  $region17: #{action_embedding.1} parent=0 // pred_fallthru
    _

</llo_original>
